<compile_context>
chip_gen: v7x
topology: tpu7x:2x2x1
jax: 0.10.0
libtpu: 0.0.40
codegen_flags: <defaults>
</compile_context>

<pallas_src>
import jax
import jax.numpy as jnp
import numpy as np
from jax.experimental import pallas as pl
from jax.experimental.pallas import tpu as pltpu

B = 2
H = W = 32            # input spatial (required by fc1: 6*15*15 == 1350)
C_OUT = 6             # conv1 output channels
KH = KW = 3           # conv1 kernel
H_CONV = H - KH + 1   # 30 (valid conv)
P = H_CONV // 2       # 15 pooled spatial
R = P * P             # 225 pooled positions per channel
R_PAD = 256           # lane-padded pooled positions
M = KH * KW           # 9 conv taps
M_PAD = 16            # sublane-padded taps
N_OFF = 4             # 2x2 pooling offsets
FC_OUT = 10
FC_PAD = 16           # FC outputs padded on sublanes of the weight
MAX_BBLK = 256        # cap images/block: keeps blocks far under v7x's 64 MiB VMEM


def _num_parallel_blocks(batch):
    """>=2 parallel grid blocks when the chip has multiple TensorCores (v7x);
    fold the whole batch into one grid step on single-TC chips (v5e/v6e) to
    amortize the ~0.35us/step overhead."""
    try:
        n_tc = int(getattr(jax.devices()[0], "num_cores", 1))
    except Exception:
        n_tc = 1
    n_tc = max(1, min(n_tc, 8))
    return max(1, min(batch, n_tc))


def make_net_kernel(bblk):
    def net_kernel(q_ref, wc_ref, bc_ref, wfc_ref, bfc_ref, o_ref, flat_ref):
        # conv1 for all images & pool offsets of this block: one bf16 MXU matmul
        # (6, 16) x (16, bblk*4*256) -> (6, bblk*4*256), f32 accumulation.
        conv = jnp.dot(wc_ref[...], q_ref[0],
                       preferred_element_type=jnp.float32)
        bc = bc_ref[...]                                      # (6, 1) f32
        for b in range(bblk):
            base = b * N_OFF * R_PAD
            # 2x2 max-pool == running max over the 4 offset slices
            # (static, 128-aligned lane slices -> vreg selects, no XLU).
            pooled = conv[:, base:base + R_PAD]
            for k in range(1, N_OFF):
                pooled = jnp.maximum(
                    pooled, conv[:, base + k * R_PAD:base + (k + 1) * R_PAD])
            # Bias + ReLU hoisted: relu(maxpool(relu(x+b))) == relu(maxpool(x)+b).
            pooled = jnp.maximum(pooled + bc, 0.0)            # (6, 256) f32
            # Flatten channel-major (lane index c*256 + r) into row b of scratch.
            for c in range(C_OUT):
                flat_ref[b:b + 1, c * R_PAD:(c + 1) * R_PAD] = pooled[c:c + 1, :]
        # fc1 as one K=1536 contraction for the whole block:
        # (bblk, 1536) x (16, 1536)^T -> (bblk, 16), fp32 accumulation.
        pf = flat_ref[...]                                    # (bblk, 1536) f32
        wfc = wfc_ref[...].astype(jnp.float32)                # (16, 1536)
        out = jax.lax.dot_general(pf, wfc, (((1,), (1,)), ((), ())),
                                  preferred_element_type=jnp.float32)
        o_ref[0] = out + bfc_ref[...]                         # (bblk, 16)
    return net_kernel


def build_pooled_patches(x, nblk, bblk):
    """x: (B,1,32,32) -> bf16 (nblk, 16, bblk*4*256) conv patches at pooled
    resolution; lanes are image-major then offset-major (b*1024 + k*256 + r)."""
    xs = x[:, 0].astype(jnp.float32)                          # (B, 32, 32)
    nb = xs.shape[0]
    offs = []
    for oa in range(2):                                       # pooling offsets
        for ob in range(2):
            taps = []
            for di in range(KH):
                for dj in range(KW):
                    # rows 2p+oa+di, cols 2q+ob+dj for p,q in 0..14
                    sub = jax.lax.slice(
                        xs,
                        (0, oa + di, ob + dj),
                        (nb, oa + di + 2 * P - 1, ob + dj + 2 * P - 1),
                        (1, 2, 2))                            # (B, 15, 15)
                    taps.append(sub.reshape(nb, R))
            t = jnp.stack(taps, axis=1)                       # (B, 9, 225)
            t = jnp.pad(t, ((0, 0), (0, M_PAD - M), (0, R_PAD - R)))
            offs.append(t)                                    # (B, 16, 256)
    q = jnp.concatenate(offs, axis=-1).astype(jnp.bfloat16)   # (B, 16, 1024)
    b_pad = nblk * bblk
    if b_pad != nb:
        q = jnp.pad(q, ((0, b_pad - nb), (0, 0), (0, 0)))
    q = q.reshape(nblk, bblk, M_PAD, N_OFF * R_PAD)
    q = q.transpose(0, 2, 1, 3).reshape(nblk, M_PAD, bblk * N_OFF * R_PAD)
    return q


@jax.jit
def net_forward(x, conv_w, conv_b, fc_w, fc_b):
    nb = x.shape[0]
    nblk = _num_parallel_blocks(nb)
    bblk = pl.cdiv(nb, nblk)
    if bblk > MAX_BBLK:
        bblk = MAX_BBLK
        nblk = pl.cdiv(nb, bblk)

    q = build_pooled_patches(x, nblk, bblk)                   # bf16 patches

    wc = jnp.pad(conv_w.reshape(C_OUT, M),
                 ((0, 0), (0, M_PAD - M))).astype(jnp.bfloat16)        # (6, 16)
    bc = conv_b.reshape(C_OUT, 1).astype(jnp.float32)                  # (6, 1)
    # fc weight (10, 1350) -> (16, 1536): outputs on sublanes (10 -> 16 zero pad),
    # reduction dim c*256 + (p*15+q) on lanes; padded pooled positions (225..255)
    # stay zero so the lane padding never contributes to the logits.
    wfc = fc_w.reshape(FC_OUT, C_OUT, R)
    wfc = jnp.pad(wfc, ((0, FC_PAD - FC_OUT), (0, 0), (0, R_PAD - R)))
    wfc = wfc.reshape(FC_PAD, C_OUT * R_PAD).astype(jnp.bfloat16)      # (16, 1536)
    bfc = jnp.pad(fc_b, (0, FC_PAD - FC_OUT)).reshape(1, FC_PAD)
    bfc = bfc.astype(jnp.float32)                                      # (1, 16)

    out = pl.pallas_call(
        make_net_kernel(bblk),
        out_shape=jax.ShapeDtypeStruct((nblk, bblk, FC_PAD), jnp.float32),
        grid_spec=pltpu.PrefetchScalarGridSpec(
            num_scalar_prefetch=0,
            grid=(nblk,),
            in_specs=[
                pl.BlockSpec((1, M_PAD, bblk * N_OFF * R_PAD),
                             lambda i: (i, 0, 0)),
                pl.BlockSpec((C_OUT, M_PAD), lambda i: (0, 0)),
                pl.BlockSpec((C_OUT, 1), lambda i: (0, 0)),
                pl.BlockSpec((FC_PAD, C_OUT * R_PAD), lambda i: (0, 0)),
                pl.BlockSpec((1, FC_PAD), lambda i: (0, 0)),
            ],
            out_specs=pl.BlockSpec((1, bblk, FC_PAD), lambda i: (i, 0, 0)),
            scratch_shapes=[pltpu.VMEM((bblk, C_OUT * R_PAD), jnp.float32)],
        ),
        compiler_params=pltpu.CompilerParams(
            dimension_semantics=("parallel",)),
    )(q, wc, bc, wfc, bfc)
    return out.reshape(nblk * bblk, FC_PAD)[:nb, :FC_OUT]


def net_reference(x, conv_w, conv_b, fc_w, fc_b):
    """Pure-JAX reference replicating the PyTorch forward."""
    y = jax.lax.conv_general_dilated(
        x, conv_w, window_strides=(1, 1), padding='VALID',
        dimension_numbers=('NCHW', 'OIHW', 'NCHW'))
    y = y + conv_b[None, :, None, None]
    y = jnp.maximum(y, 0.0)
    y = jax.lax.reduce_window(y, -jnp.inf, jax.lax.max,
                              (1, 1, 2, 2), (1, 1, 2, 2), 'VALID')
    y = jnp.maximum(y, 0.0)
    y = y.reshape(y.shape[0], -1)
    return y @ fc_w.T + fc_b


if __name__ == "__main__":
    key = jax.random.PRNGKey(0)
    kx, kcw, kcb, kfw, kfb = jax.random.split(key, 5)
    x = jax.random.normal(kx, (B, 1, H, W), dtype=jnp.float32)

    # Deterministic params, PyTorch-default-style uniform bounds (1/sqrt(fan_in)).
    conv_bound = 1.0 / np.sqrt(1 * KH * KW)
    fc_bound = 1.0 / np.sqrt(C_OUT * P * P)
    conv_w = jax.random.uniform(kcw, (C_OUT, 1, KH, KW), jnp.float32,
                                -conv_bound, conv_bound)
    conv_b = jax.random.uniform(kcb, (C_OUT,), jnp.float32,
                                -conv_bound, conv_bound)
    fc_w = jax.random.uniform(kfw, (FC_OUT, C_OUT * P * P), jnp.float32,
                              -fc_bound, fc_bound)
    fc_b = jax.random.uniform(kfb, (FC_OUT,), jnp.float32, -fc_bound, fc_bound)

    out = jax.block_until_ready(net_forward(x, conv_w, conv_b, fc_w, fc_b))
    ref = net_reference(x, conv_w, conv_b, fc_w, fc_b)
    np.testing.assert_allclose(np.asarray(out), np.asarray(ref),
                               rtol=1e-2, atol=1e-2)
    print("KERNEL_OK")
</pallas_src>

<mosaic_0001>
module attributes {stable_mosaic.version = 11 : i64} {
  func.func @net_kernel(%arg0: i32, %arg1: memref<1x16x2048xbf16, #tpu.memory_space<vmem>>, %arg2: memref<6x16xbf16, #tpu.memory_space<vmem>>, %arg3: memref<6x1xf32, #tpu.memory_space<vmem>>, %arg4: memref<16x1536xbf16, #tpu.memory_space<vmem>>, %arg5: memref<1x16xf32, #tpu.memory_space<vmem>>, %arg6: memref<1x2x16xf32, #tpu.memory_space<vmem>>, %arg7: memref<2x1536xf32, #tpu.memory_space<vmem>>) attributes {dimension_semantics = [#tpu.dimension_semantics<parallel>], iteration_bounds = array<i64: 1>, scalar_prefetch = 0 : i64, scratch_operands = 1 : i64, tpu.core_type = #tpu.core_type<tc>, window_params = [{transform_indices = @transform_0, window_bounds = array<i64: 1, 16, 2048>}, {pipeline_mode = #tpu.pipeline_mode<synchronous>, transform_indices = @transform_1, window_bounds = array<i64: 6, 16>}, {pipeline_mode = #tpu.pipeline_mode<synchronous>, transform_indices = @transform_2, window_bounds = array<i64: 6, 1>}, {pipeline_mode = #tpu.pipeline_mode<synchronous>, transform_indices = @transform_3, window_bounds = array<i64: 16, 1536>}, {pipeline_mode = #tpu.pipeline_mode<synchronous>, transform_indices = @transform_4, window_bounds = array<i64: 1, 16>}, {transform_indices = @transform_5, window_bounds = array<i64: 1, 2, 16>}]} {
    %c0 = arith.constant 0 : index
    %c0_0 = arith.constant 0 : index
    %0 = vector.load %arg2[%c0, %c0_0] : memref<6x16xbf16, #tpu.memory_space<vmem>>, vector<6x16xbf16>
    %c0_1 = arith.constant 0 : index
    %c0_2 = arith.constant 0 : index
    %c0_3 = arith.constant 0 : index
    %1 = vector.load %arg1[%c0_1, %c0_2, %c0_3] : memref<1x16x2048xbf16, #tpu.memory_space<vmem>>, vector<1x16x2048xbf16>
    %2 = vector.shape_cast %1 : vector<1x16x2048xbf16> to vector<16x2048xbf16>
    %cst = arith.constant dense<0.000000e+00> : vector<6x2048xf32>
    %3 = tpu.matmul %0, %2, %cst {dimension_numbers = #tpu.dot_dimension_numbers<[1], [0], [0], [1], [0, 0, 1, 1], [], []>} : vector<6x16xbf16>, vector<16x2048xbf16>, vector<6x2048xf32> -> vector<6x2048xf32>
    %c0_4 = arith.constant 0 : index
    %c0_5 = arith.constant 0 : index
    %4 = vector.load %arg3[%c0_4, %c0_5] : memref<6x1xf32, #tpu.memory_space<vmem>>, vector<6x1xf32>
    %5 = vector.extract_strided_slice %3 {offsets = [0, 0], sizes = [6, 256], strides = [1, 1]} : vector<6x2048xf32> to vector<6x256xf32>
    %6 = vector.extract_strided_slice %3 {offsets = [0, 256], sizes = [6, 256], strides = [1, 1]} : vector<6x2048xf32> to vector<6x256xf32>
    %7 = arith.maximumf %5, %6 : vector<6x256xf32>
    %8 = vector.extract_strided_slice %3 {offsets = [0, 512], sizes = [6, 256], strides = [1, 1]} : vector<6x2048xf32> to vector<6x256xf32>
    %9 = arith.maximumf %7, %8 : vector<6x256xf32>
    %10 = vector.extract_strided_slice %3 {offsets = [0, 768], sizes = [6, 256], strides = [1, 1]} : vector<6x2048xf32> to vector<6x256xf32>
    %11 = arith.maximumf %9, %10 : vector<6x256xf32>
    %12 = vector.broadcast %4 : vector<6x1xf32> to vector<6x256xf32>
    %13 = arith.addf %11, %12 : vector<6x256xf32>
    %cst_6 = arith.constant 0.000000e+00 : f32
    %14 = vector.broadcast %cst_6 : f32 to vector<6x256xf32>
    %15 = arith.maximumf %13, %14 : vector<6x256xf32>
    %16 = vector.extract_strided_slice %15 {offsets = [0, 0], sizes = [1, 256], strides = [1, 1]} : vector<6x256xf32> to vector<1x256xf32>
    %c0_7 = arith.constant 0 : index
    %c0_8 = arith.constant 0 : index
    %17 = vector.load %arg7[%c0_7, %c0_8] : memref<2x1536xf32, #tpu.memory_space<vmem>>, vector<1x256xf32>
    tpu.vector_store %arg7[%c0_7, %c0_8], %16 {strides = array<i32>} : memref<2x1536xf32, #tpu.memory_space<vmem>>, vector<1x256xf32>,
    %18 = vector.extract_strided_slice %15 {offsets = [1, 0], sizes = [1, 256], strides = [1, 1]} : vector<6x256xf32> to vector<1x256xf32>
    %c0_9 = arith.constant 0 : index
    %c256 = arith.constant 256 : index
    %19 = vector.load %arg7[%c0_9, %c256] : memref<2x1536xf32, #tpu.memory_space<vmem>>, vector<1x256xf32>
    tpu.vector_store %arg7[%c0_9, %c256], %18 {strides = array<i32>} : memref<2x1536xf32, #tpu.memory_space<vmem>>, vector<1x256xf32>,
    %20 = vector.extract_strided_slice %15 {offsets = [2, 0], sizes = [1, 256], strides = [1, 1]} : vector<6x256xf32> to vector<1x256xf32>
    %c0_10 = arith.constant 0 : index
    %c512 = arith.constant 512 : index
    %21 = vector.load %arg7[%c0_10, %c512] : memref<2x1536xf32, #tpu.memory_space<vmem>>, vector<1x256xf32>
    tpu.vector_store %arg7[%c0_10, %c512], %20 {strides = array<i32>} : memref<2x1536xf32, #tpu.memory_space<vmem>>, vector<1x256xf32>,
    %22 = vector.extract_strided_slice %15 {offsets = [3, 0], sizes = [1, 256], strides = [1, 1]} : vector<6x256xf32> to vector<1x256xf32>
    %c0_11 = arith.constant 0 : index
    %c768 = arith.constant 768 : index
    %23 = vector.load %arg7[%c0_11, %c768] : memref<2x1536xf32, #tpu.memory_space<vmem>>, vector<1x256xf32>
    tpu.vector_store %arg7[%c0_11, %c768], %22 {strides = array<i32>} : memref<2x1536xf32, #tpu.memory_space<vmem>>, vector<1x256xf32>,
    %24 = vector.extract_strided_slice %15 {offsets = [4, 0], sizes = [1, 256], strides = [1, 1]} : vector<6x256xf32> to vector<1x256xf32>
    %c0_12 = arith.constant 0 : index
    %c1024 = arith.constant 1024 : index
    %25 = vector.load %arg7[%c0_12, %c1024] : memref<2x1536xf32, #tpu.memory_space<vmem>>, vector<1x256xf32>
    tpu.vector_store %arg7[%c0_12, %c1024], %24 {strides = array<i32>} : memref<2x1536xf32, #tpu.memory_space<vmem>>, vector<1x256xf32>,
    %26 = vector.extract_strided_slice %15 {offsets = [5, 0], sizes = [1, 256], strides = [1, 1]} : vector<6x256xf32> to vector<1x256xf32>
    %c0_13 = arith.constant 0 : index
    %c1280 = arith.constant 1280 : index
    %27 = vector.load %arg7[%c0_13, %c1280] : memref<2x1536xf32, #tpu.memory_space<vmem>>, vector<1x256xf32>
    tpu.vector_store %arg7[%c0_13, %c1280], %26 {strides = array<i32>} : memref<2x1536xf32, #tpu.memory_space<vmem>>, vector<1x256xf32>,
    %28 = vector.extract_strided_slice %3 {offsets = [0, 1024], sizes = [6, 256], strides = [1, 1]} : vector<6x2048xf32> to vector<6x256xf32>
    %29 = vector.extract_strided_slice %3 {offsets = [0, 1280], sizes = [6, 256], strides = [1, 1]} : vector<6x2048xf32> to vector<6x256xf32>
    %30 = arith.maximumf %28, %29 : vector<6x256xf32>
    %31 = vector.extract_strided_slice %3 {offsets = [0, 1536], sizes = [6, 256], strides = [1, 1]} : vector<6x2048xf32> to vector<6x256xf32>
    %32 = arith.maximumf %30, %31 : vector<6x256xf32>
    %33 = vector.extract_strided_slice %3 {offsets = [0, 1792], sizes = [6, 256], strides = [1, 1]} : vector<6x2048xf32> to vector<6x256xf32>
    %34 = arith.maximumf %32, %33 : vector<6x256xf32>
    %35 = vector.broadcast %4 : vector<6x1xf32> to vector<6x256xf32>
    %36 = arith.addf %34, %35 : vector<6x256xf32>
    %cst_14 = arith.constant 0.000000e+00 : f32
    %37 = vector.broadcast %cst_14 : f32 to vector<6x256xf32>
    %38 = arith.maximumf %36, %37 : vector<6x256xf32>
    %39 = vector.extract_strided_slice %38 {offsets = [0, 0], sizes = [1, 256], strides = [1, 1]} : vector<6x256xf32> to vector<1x256xf32>
    %c1 = arith.constant 1 : index
    %c0_15 = arith.constant 0 : index
    %40 = vector.load %arg7[%c1, %c0_15] : memref<2x1536xf32, #tpu.memory_space<vmem>>, vector<1x256xf32>
    tpu.vector_store %arg7[%c1, %c0_15], %39 {strides = array<i32>} : memref<2x1536xf32, #tpu.memory_space<vmem>>, vector<1x256xf32>,
    %41 = vector.extract_strided_slice %38 {offsets = [1, 0], sizes = [1, 256], strides = [1, 1]} : vector<6x256xf32> to vector<1x256xf32>
    %c1_16 = arith.constant 1 : index
    %c256_17 = arith.constant 256 : index
    %42 = vector.load %arg7[%c1_16, %c256_17] : memref<2x1536xf32, #tpu.memory_space<vmem>>, vector<1x256xf32>
    tpu.vector_store %arg7[%c1_16, %c256_17], %41 {strides = array<i32>} : memref<2x1536xf32, #tpu.memory_space<vmem>>, vector<1x256xf32>,
    %43 = vector.extract_strided_slice %38 {offsets = [2, 0], sizes = [1, 256], strides = [1, 1]} : vector<6x256xf32> to vector<1x256xf32>
    %c1_18 = arith.constant 1 : index
    %c512_19 = arith.constant 512 : index
    %44 = vector.load %arg7[%c1_18, %c512_19] : memref<2x1536xf32, #tpu.memory_space<vmem>>, vector<1x256xf32>
    tpu.vector_store %arg7[%c1_18, %c512_19], %43 {strides = array<i32>} : memref<2x1536xf32, #tpu.memory_space<vmem>>, vector<1x256xf32>,
    %45 = vector.extract_strided_slice %38 {offsets = [3, 0], sizes = [1, 256], strides = [1, 1]} : vector<6x256xf32> to vector<1x256xf32>
    %c1_20 = arith.constant 1 : index
    %c768_21 = arith.constant 768 : index
    %46 = vector.load %arg7[%c1_20, %c768_21] : memref<2x1536xf32, #tpu.memory_space<vmem>>, vector<1x256xf32>
    tpu.vector_store %arg7[%c1_20, %c768_21], %45 {strides = array<i32>} : memref<2x1536xf32, #tpu.memory_space<vmem>>, vector<1x256xf32>,
    %47 = vector.extract_strided_slice %38 {offsets = [4, 0], sizes = [1, 256], strides = [1, 1]} : vector<6x256xf32> to vector<1x256xf32>
    %c1_22 = arith.constant 1 : index
    %c1024_23 = arith.constant 1024 : index
    %48 = vector.load %arg7[%c1_22, %c1024_23] : memref<2x1536xf32, #tpu.memory_space<vmem>>, vector<1x256xf32>
    tpu.vector_store %arg7[%c1_22, %c1024_23], %47 {strides = array<i32>} : memref<2x1536xf32, #tpu.memory_space<vmem>>, vector<1x256xf32>,
    %49 = vector.extract_strided_slice %38 {offsets = [5, 0], sizes = [1, 256], strides = [1, 1]} : vector<6x256xf32> to vector<1x256xf32>
    %c1_24 = arith.constant 1 : index
    %c1280_25 = arith.constant 1280 : index
    %50 = vector.load %arg7[%c1_24, %c1280_25] : memref<2x1536xf32, #tpu.memory_space<vmem>>, vector<1x256xf32>
    tpu.vector_store %arg7[%c1_24, %c1280_25], %49 {strides = array<i32>} : memref<2x1536xf32, #tpu.memory_space<vmem>>, vector<1x256xf32>,
    %c0_26 = arith.constant 0 : index
    %c0_27 = arith.constant 0 : index
    %51 = vector.load %arg7[%c0_26, %c0_27] : memref<2x1536xf32, #tpu.memory_space<vmem>>, vector<2x1536xf32>
    %c0_28 = arith.constant 0 : index
    %c0_29 = arith.constant 0 : index
    %52 = vector.load %arg4[%c0_28, %c0_29] : memref<16x1536xbf16, #tpu.memory_space<vmem>>, vector<16x1536xbf16>
    %53 = arith.extf %52 : vector<16x1536xbf16> to vector<16x1536xf32>
    %cst_30 = arith.constant dense<0.000000e+00> : vector<2x16xf32>
    %54 = tpu.matmul %51, %53, %cst_30 {dimension_numbers = #tpu.dot_dimension_numbers<[1], [1], [0], [0], [0, 0, 1, 0], [], []>} : vector<2x1536xf32>, vector<16x1536xf32>, vector<2x16xf32> -> vector<2x16xf32>
    %c0_31 = arith.constant 0 : index
    %c0_32 = arith.constant 0 : index
    %55 = vector.load %arg5[%c0_31, %c0_32] : memref<1x16xf32, #tpu.memory_space<vmem>>, vector<1x16xf32>
    %56 = vector.broadcast %55 : vector<1x16xf32> to vector<2x16xf32>
    %57 = arith.addf %54, %56 : vector<2x16xf32>
    %c0_33 = arith.constant 0 : index
    %c0_34 = arith.constant 0 : index
    %c0_35 = arith.constant 0 : index
    %58 = vector.load %arg6[%c0_33, %c0_34, %c0_35] : memref<1x2x16xf32, #tpu.memory_space<vmem>>, vector<1x2x16xf32>
    %59 = vector.shape_cast %58 : vector<1x2x16xf32> to vector<2x16xf32>
    %60 = vector.shape_cast %57 : vector<2x16xf32> to vector<1x2x16xf32>
    tpu.vector_store %arg6[%c0_33, %c0_34, %c0_35], %60 {strides = array<i32>} : memref<1x2x16xf32, #tpu.memory_space<vmem>>, vector<1x2x16xf32>,
    return
  }
  func.func @transform_0(%arg0: i32) -> (i32, i32, i32) {
    %c0_i32 = arith.constant 0 : i32
    %c0_i32_0 = arith.constant 0 : i32
    %c0_i32_1 = arith.constant 0 : i32
    return %arg0, %c0_i32, %c0_i32_0 : i32, i32, i32
  }
  func.func @transform_1(%arg0: i32) -> (i32, i32) {
    %c0_i32 = arith.constant 0 : i32
    %c0_i32_0 = arith.constant 0 : i32
    %c0_i32_1 = arith.constant 0 : i32
    return %c0_i32, %c0_i32_0 : i32, i32
  }
  func.func @transform_2(%arg0: i32) -> (i32, i32) {
    %c0_i32 = arith.constant 0 : i32
    %c0_i32_0 = arith.constant 0 : i32
    %c0_i32_1 = arith.constant 0 : i32
    return %c0_i32, %c0_i32_0 : i32, i32
  }
  func.func @transform_3(%arg0: i32) -> (i32, i32) {
    %c0_i32 = arith.constant 0 : i32
    %c0_i32_0 = arith.constant 0 : i32
    %c0_i32_1 = arith.constant 0 : i32
    return %c0_i32, %c0_i32_0 : i32, i32
  }
  func.func @transform_4(%arg0: i32) -> (i32, i32) {
    %c0_i32 = arith.constant 0 : i32
    %c0_i32_0 = arith.constant 0 : i32
    %c0_i32_1 = arith.constant 0 : i32
    return %c0_i32, %c0_i32_0 : i32, i32
  }
  func.func @transform_5(%arg0: i32) -> (i32, i32, i32) {
    %c0_i32 = arith.constant 0 : i32
    %c0_i32_0 = arith.constant 0 : i32
    %c0_i32_1 = arith.constant 0 : i32
    return %arg0, %c0_i32, %c0_i32_0 : i32, i32, i32
  }
}

</mosaic_0001>

<llo_original>
// kernel: net_forward.1
$region0: #{net_forward.1}
  #allocation0 [shape = 'u32[]', space=smem, size = 0x4, offset = 0x4, fixed_abs, tag = 'smem constant byte address 0x4 - core index']
  #allocation1 [shape = 'u32[144,128]{1,0:T(1,128)}', space=vmem, size = 0x12000, scoped, tag = 'internal scratch']
  #allocation2 [shape = 'f32[2,1536]{1,0:T(2,128)}', space=vmem, size = 0x3000, scoped, tag = 'scratch operand']
  %s0 = inlined_call_operand.vmem [shape: bf16[1,16,2048], index: 0, kind: input, shape index: {}]
  %s1 = inlined_call_operand.vmem [shape: bf16[6,16], index: 1, kind: input, shape index: {}]
  %s2 = inlined_call_operand.vmem [shape: f32[6,1], index: 2, kind: input, shape index: {}]
  %s3 = inlined_call_operand.vmem [shape: bf16[16,1536], index: 3, kind: input, shape index: {}]
  %s4 = inlined_call_operand.vmem [shape: f32[1,16], index: 4, kind: input, shape index: {}]
  %s5 = inlined_call_operand.hbm [shape: f32[1,2,16], index: 5, kind: output, shape index: {}]
  %s6 = sld [smem:[#allocation0]]
  $region30: #{net_forward.1} parent=0
    _
  %s8 = ssub.s32 1, %s6
  %s9 = scalar_select 0, %s8, %s6
  $region1: #{net_forward.1} parent=0
    #allocation3 [shape = 'u8[1024]{0}', space=vmem, size = 0x400, scoped, tag = 'output window, operand 0, single buffered']
    #allocation4 [shape = 's32[1]{0}', space=sflag, size = 0x4, scoped, tag = 'scoped memory for net_forward.1']
    %10 = vsyncpa [#allocation4], 0
    // Predicated region
    $region2: #{net_forward.1} parent=1 // pred_check
      _
    $region3: #{net_forward.1} parent=1 // pred_check_branch
      %12 = sbr.rel (0) target = $region5
    $region4: #{net_forward.1} parent=1 // pred_region
      _
    $region5: #{net_forward.1} parent=1 // pred_fallthru
      _
    // Predicated region
    $region6: #{net_forward.1} parent=1 // pred_check
      _
    $region7: #{net_forward.1} parent=1 // pred_check_branch
      %14 = sbr.rel (0) target = $region9
    $region8: #{net_forward.1} parent=1 // pred_region
      _
    $region9: #{net_forward.1} parent=1 // pred_fallthru
      _
    // Predicated region
    $region10: #{net_forward.1} parent=1 // pred_check
      _
    $region11: #{net_forward.1} parent=1 // pred_check_branch
      %16 = sbr.rel (0) target = $region13
    $region12: #{net_forward.1} parent=1 // pred_region
      _
    $region13: #{net_forward.1} parent=1 // pred_fallthru
      _
    // Predicated region
    $region14: #{net_forward.1} parent=1 // pred_check
      _
    $region15: #{net_forward.1} parent=1 // pred_check_branch
      %18 = sbr.rel (0) target = $region17
    $region16: #{net_forward.1} parent=1 // pred_region
      _
    $region17: #{net_forward.1} parent=1 // pred_fallthru
      _
    // Predicated region
    $region18: #{net_forward.1} parent=1 // pred_check
      _
    $region19: #{net_forward.1} parent=1 // pred_check_branch
      %20 = sbr.rel (0) target = $region21
    $region20: #{net_forward.1} parent=1 // pred_region
      _
    $region21: #{net_forward.1} parent=1 // pred_fallthru
      _
    %v22 = vld [vmem:[%s1] sm:$0x7]
    %v23 = vld [vmem:[%s0] sm:$0xff]
    %v24 = vld [vmem:[%s0 + $0x8] sm:$0xff]
    %v25 = vld [vmem:[%s0 + $0x10] sm:$0xff]
    %v26 = vld [vmem:[%s0 + $0x18] sm:$0xff]
    %v27 = vld [vmem:[%s0 + $0x20] sm:$0xff]
    %v28 = vld [vmem:[%s0 + $0x28] sm:$0xff]
    %v29 = vld [vmem:[%s0 + $0x30] sm:$0xff]
    %v30 = vld [vmem:[%s0 + $0x38] sm:$0xff]
    %v31 = vld [vmem:[%s0 + $0x40] sm:$0xff]
    %v32 = vld [vmem:[%s0 + $0x48] sm:$0xff]
    %v33 = vld [vmem:[%s0 + $0x50] sm:$0xff]
    %v34 = vld [vmem:[%s0 + $0x58] sm:$0xff]
    %v35 = vld [vmem:[%s0 + $0x60] sm:$0xff]
    %v36 = vld [vmem:[%s0 + $0x68] sm:$0xff]
    %v37 = vld [vmem:[%s0 + $0x70] sm:$0xff]
    %v38 = vld [vmem:[%s0 + $0x78] sm:$0xff]
    %v55 = vunpack.c.l.b16 %v23
    %v56 = vunpack.c.h.b16 %v23
    %v57 = vunpack.c.l.b16 %v24
    %v58 = vunpack.c.h.b16 %v24
    %v59 = vunpack.c.l.b16 %v25
    %v60 = vunpack.c.h.b16 %v25
    %v61 = vunpack.c.l.b16 %v26
    %v62 = vunpack.c.h.b16 %v26
    %v63 = vunpack.c.l.b16 %v27
    %v64 = vunpack.c.h.b16 %v27
    %v65 = vunpack.c.l.b16 %v28
    %v66 = vunpack.c.h.b16 %v28
    %v67 = vunpack.c.l.b16 %v29
    %v68 = vunpack.c.h.b16 %v29
    %v69 = vunpack.c.l.b16 %v30
    %v70 = vunpack.c.h.b16 %v30
    %v71 = vunpack.c.l.b16 %v31
    %v72 = vunpack.c.h.b16 %v31
    %v73 = vunpack.c.l.b16 %v32
    %v74 = vunpack.c.h.b16 %v32
    %v75 = vunpack.c.l.b16 %v33
    %v76 = vunpack.c.h.b16 %v33
    %v77 = vunpack.c.l.b16 %v34
    %v78 = vunpack.c.h.b16 %v34
    %v79 = vunpack.c.l.b16 %v35
    %v80 = vunpack.c.h.b16 %v35
    %v81 = vunpack.c.l.b16 %v36
    %v82 = vunpack.c.h.b16 %v36
    %v83 = vunpack.c.l.b16 %v37
    %v84 = vunpack.c.h.b16 %v37
    %v85 = vunpack.c.l.b16 %v38
    %v86 = vunpack.c.h.b16 %v38
    %v87 = vpack.c.b16 %v71, %v55
    %v88 = vpack.c.b16 %v72, %v56
    %v89 = vpack.c.b16 %v73, %v57
    %v90 = vpack.c.b16 %v74, %v58
    %v91 = vpack.c.b16 %v75, %v59
    %v92 = vpack.c.b16 %v76, %v60
    %v93 = vpack.c.b16 %v77, %v61
    %v94 = vpack.c.b16 %v78, %v62
    %v95 = vpack.c.b16 %v79, %v63
    %v96 = vpack.c.b16 %v80, %v64
    %v97 = vpack.c.b16 %v81, %v65
    %v98 = vpack.c.b16 %v82, %v66
    %v99 = vpack.c.b16 %v83, %v67
    %v100 = vpack.c.b16 %v84, %v68
    %v101 = vpack.c.b16 %v85, %v69
    %v102 = vpack.c.b16 %v86, %v70
    %vm119 = vcmask 130048
    %v121 = vsel %vm119, %v22, 0
    %123 = vmatprep.subr.bf16.mxu0 %v88
    %124 = vmatpush1.bf16.msra.mxu0 %v87
    %125 = vmatprep.subr.bf16.mxu0 0
    %126 = vmatpush1.bf16.msra.mxu0 0
    %127 = vmatprep.subr.bf16.mxu0 0
    %128 = vmatpush1.bf16.msra.mxu0 0
    %129 = vmatprep.subr.bf16.mxu0 0
    %130 = vmatpush1.bf16.msra.mxu0 0
    %131 = vmatprep.subr.bf16.mxu0 0
    %132 = vmatpush1.bf16.msra.mxu0 0
    %133 = vmatprep.subr.bf16.mxu0 0
    %134 = vmatpush1.bf16.msra.mxu0 0
    %135 = vmatprep.subr.bf16.mxu0 0
    %136 = vmatpush1.bf16.msra.mxu0 0
    %137 = vmatprep.subr.bf16.mxu0 0
    %138 = vmatpush1.bf16.msra.mxu0 0
    %139 = vmatprep.subr.bf16.mxu0 0
    %140 = vmatpush1.bf16.msra.mxu0 0
    %141 = vmatprep.subr.bf16.mxu0 0
    %142 = vmatpush1.bf16.msra.mxu0 0
    %143 = vmatprep.subr.bf16.mxu0 0
    %144 = vmatpush1.bf16.msra.mxu0 0
    %145 = vmatprep.subr.bf16.mxu0 0
    %146 = vmatpush1.bf16.msra.mxu0 0
    %147 = vmatprep.subr.bf16.mxu0 0
    %148 = vmatpush1.bf16.msra.mxu0 0
    %149 = vmatprep.subr.bf16.mxu0 0
    %150 = vmatpush1.bf16.msra.mxu0 0
    %151 = vmatprep.subr.bf16.mxu0 0
    %152 = vmatpush1.bf16.msra.mxu0 0
    %153 = vmatprep.subr.bf16.mxu0 0
    %154 = vmatpush1.bf16.msra.mxu0 0
    %155 = vmatprep.mubr.bf16.mxu0 0
    %156 = vmatmul.mubr.bf16.gmra.mrb[0].mxu0 %v121
    %v157 = vpop.f32.mrb[0].mxu0
    %v158 = vadd.f32 0.0, %v157
    %v159 = vpop.f32.mrb[0].mxu0
    %v160 = vadd.f32 0.0, %v159
    %v161 = vpop.f32.mrb[0].mxu0
    %v162 = vpop.f32.mrb[0].mxu0
    %163 = vdwg.mxu0
    %164 = vmatprep.subr.bf16.mxu0 %v90
    %165 = vmatpush1.bf16.msra.mxu0 %v89
    %166 = vmatprep.subr.bf16.mxu0 0
    %167 = vmatpush1.bf16.msra.mxu0 0
    %168 = vmatprep.subr.bf16.mxu0 0
    %169 = vmatpush1.bf16.msra.mxu0 0
    %170 = vmatprep.subr.bf16.mxu0 0
    %171 = vmatpush1.bf16.msra.mxu0 0
    %172 = vmatprep.subr.bf16.mxu0 0
    %173 = vmatpush1.bf16.msra.mxu0 0
    %174 = vmatprep.subr.bf16.mxu0 0
    %175 = vmatpush1.bf16.msra.mxu0 0
    %176 = vmatprep.subr.bf16.mxu0 0
    %177 = vmatpush1.bf16.msra.mxu0 0
    %178 = vmatprep.subr.bf16.mxu0 0
    %179 = vmatpush1.bf16.msra.mxu0 0
    %180 = vmatprep.subr.bf16.mxu0 0
    %181 = vmatpush1.bf16.msra.mxu0 0
    %182 = vmatprep.subr.bf16.mxu0 0
    %183 = vmatpush1.bf16.msra.mxu0 0
    %184 = vmatprep.subr.bf16.mxu0 0
    %185 = vmatpush1.bf16.msra.mxu0 0
    %186 = vmatprep.subr.bf16.mxu0 0
    %187 = vmatpush1.bf16.msra.mxu0 0
    %188 = vmatprep.subr.bf16.mxu0 0
    %189 = vmatpush1.bf16.msra.mxu0 0
    %190 = vmatprep.subr.bf16.mxu0 0
    %191 = vmatpush1.bf16.msra.mxu0 0
    %192 = vmatprep.subr.bf16.mxu0 0
    %193 = vmatpush1.bf16.msra.mxu0 0
    %194 = vmatprep.subr.bf16.mxu0 0
    %195 = vmatpush1.bf16.msra.mxu0 0
    %196 = vmatprep.mubr.bf16.mxu0 0
    %197 = vmatmul.mubr.bf16.gmra.mrb[0].mxu0 %v121
    %v198 = vpop.f32.mrb[0].mxu0
    %v199 = vadd.f32 0.0, %v198
    %v200 = vpop.f32.mrb[0].mxu0
    %v201 = vadd.f32 0.0, %v200
    %v202 = vpop.f32.mrb[0].mxu0
    %v203 = vpop.f32.mrb[0].mxu0
    %204 = vdwg.mxu0
    %205 = vmatprep.subr.bf16.mxu0 %v92
    %206 = vmatpush1.bf16.msra.mxu0 %v91
    %207 = vmatprep.subr.bf16.mxu0 0
    %208 = vmatpush1.bf16.msra.mxu0 0
    %209 = vmatprep.subr.bf16.mxu0 0
    %210 = vmatpush1.bf16.msra.mxu0 0
    %211 = vmatprep.subr.bf16.mxu0 0
    %212 = vmatpush1.bf16.msra.mxu0 0
    %213 = vmatprep.subr.bf16.mxu0 0
    %214 = vmatpush1.bf16.msra.mxu0 0
    %215 = vmatprep.subr.bf16.mxu0 0
    %216 = vmatpush1.bf16.msra.mxu0 0
    %217 = vmatprep.subr.bf16.mxu0 0
    %218 = vmatpush1.bf16.msra.mxu0 0
    %219 = vmatprep.subr.bf16.mxu0 0
    %220 = vmatpush1.bf16.msra.mxu0 0
    %221 = vmatprep.subr.bf16.mxu0 0
    %222 = vmatpush1.bf16.msra.mxu0 0
    %223 = vmatprep.subr.bf16.mxu0 0
    %224 = vmatpush1.bf16.msra.mxu0 0
    %225 = vmatprep.subr.bf16.mxu0 0
    %226 = vmatpush1.bf16.msra.mxu0 0
    %227 = vmatprep.subr.bf16.mxu0 0
    %228 = vmatpush1.bf16.msra.mxu0 0
    %229 = vmatprep.subr.bf16.mxu0 0
    %230 = vmatpush1.bf16.msra.mxu0 0
    %231 = vmatprep.subr.bf16.mxu0 0
    %232 = vmatpush1.bf16.msra.mxu0 0
    %233 = vmatprep.subr.bf16.mxu0 0
    %234 = vmatpush1.bf16.msra.mxu0 0
    %235 = vmatprep.subr.bf16.mxu0 0
    %236 = vmatpush1.bf16.msra.mxu0 0
    %237 = vmatprep.mubr.bf16.mxu0 0
    %238 = vmatmul.mubr.bf16.gmra.mrb[0].mxu0 %v121
    %v239 = vpop.f32.mrb[0].mxu0
    %v240 = vadd.f32 0.0, %v239
    %v241 = vpop.f32.mrb[0].mxu0
    %v242 = vadd.f32 0.0, %v241
    %v243 = vpop.f32.mrb[0].mxu0
    %v244 = vpop.f32.mrb[0].mxu0
    %245 = vdwg.mxu0
    %246 = vmatprep.subr.bf16.mxu0 %v94
    %247 = vmatpush1.bf16.msra.mxu0 %v93
    %248 = vmatprep.subr.bf16.mxu0 0
    %249 = vmatpush1.bf16.msra.mxu0 0
    %250 = vmatprep.subr.bf16.mxu0 0
    %251 = vmatpush1.bf16.msra.mxu0 0
    %252 = vmatprep.subr.bf16.mxu0 0
    %253 = vmatpush1.bf16.msra.mxu0 0
    %254 = vmatprep.subr.bf16.mxu0 0
    %255 = vmatpush1.bf16.msra.mxu0 0
    %256 = vmatprep.subr.bf16.mxu0 0
    %257 = vmatpush1.bf16.msra.mxu0 0
    %258 = vmatprep.subr.bf16.mxu0 0
    %259 = vmatpush1.bf16.msra.mxu0 0
    %260 = vmatprep.subr.bf16.mxu0 0
    %261 = vmatpush1.bf16.msra.mxu0 0
    %262 = vmatprep.subr.bf16.mxu0 0
    %263 = vmatpush1.bf16.msra.mxu0 0
    %264 = vmatprep.subr.bf16.mxu0 0
    %265 = vmatpush1.bf16.msra.mxu0 0
    %266 = vmatprep.subr.bf16.mxu0 0
    %267 = vmatpush1.bf16.msra.mxu0 0
    %268 = vmatprep.subr.bf16.mxu0 0
    %269 = vmatpush1.bf16.msra.mxu0 0
    %270 = vmatprep.subr.bf16.mxu0 0
    %271 = vmatpush1.bf16.msra.mxu0 0
    %272 = vmatprep.subr.bf16.mxu0 0
    %273 = vmatpush1.bf16.msra.mxu0 0
    %274 = vmatprep.subr.bf16.mxu0 0
    %275 = vmatpush1.bf16.msra.mxu0 0
    %276 = vmatprep.subr.bf16.mxu0 0
    %277 = vmatpush1.bf16.msra.mxu0 0
    %278 = vmatprep.mubr.bf16.mxu0 0
    %279 = vmatmul.mubr.bf16.gmra.mrb[0].mxu0 %v121
    %v280 = vpop.f32.mrb[0].mxu0
    %v281 = vadd.f32 0.0, %v280
    %v282 = vpop.f32.mrb[0].mxu0
    %v283 = vadd.f32 0.0, %v282
    %v284 = vpop.f32.mrb[0].mxu0
    %v285 = vpop.f32.mrb[0].mxu0
    %286 = vdwg.mxu0
    %287 = vmatprep.subr.bf16.mxu0 %v96
    %288 = vmatpush1.bf16.msra.mxu0 %v95
    %289 = vmatprep.subr.bf16.mxu0 0
    %290 = vmatpush1.bf16.msra.mxu0 0
    %291 = vmatprep.subr.bf16.mxu0 0
    %292 = vmatpush1.bf16.msra.mxu0 0
    %293 = vmatprep.subr.bf16.mxu0 0
    %294 = vmatpush1.bf16.msra.mxu0 0
    %295 = vmatprep.subr.bf16.mxu0 0
    %296 = vmatpush1.bf16.msra.mxu0 0
    %297 = vmatprep.subr.bf16.mxu0 0
    %298 = vmatpush1.bf16.msra.mxu0 0
    %299 = vmatprep.subr.bf16.mxu0 0
    %300 = vmatpush1.bf16.msra.mxu0 0
    %301 = vmatprep.subr.bf16.mxu0 0
    %302 = vmatpush1.bf16.msra.mxu0 0
    %303 = vmatprep.subr.bf16.mxu0 0
    %304 = vmatpush1.bf16.msra.mxu0 0
    %305 = vmatprep.subr.bf16.mxu0 0
    %306 = vmatpush1.bf16.msra.mxu0 0
    %307 = vmatprep.subr.bf16.mxu0 0
    %308 = vmatpush1.bf16.msra.mxu0 0
    %309 = vmatprep.subr.bf16.mxu0 0
    %310 = vmatpush1.bf16.msra.mxu0 0
    %311 = vmatprep.subr.bf16.mxu0 0
    %312 = vmatpush1.bf16.msra.mxu0 0
    %313 = vmatprep.subr.bf16.mxu0 0
    %314 = vmatpush1.bf16.msra.mxu0 0
    %315 = vmatprep.subr.bf16.mxu0 0
    %316 = vmatpush1.bf16.msra.mxu0 0
    %317 = vmatprep.subr.bf16.mxu0 0
    %318 = vmatpush1.bf16.msra.mxu0 0
    %319 = vmatprep.mubr.bf16.mxu0 0
    %320 = vmatmul.mubr.bf16.gmra.mrb[0].mxu0 %v121
    %v321 = vpop.f32.mrb[0].mxu0
    %v322 = vadd.f32 0.0, %v321
    %v323 = vpop.f32.mrb[0].mxu0
    %v324 = vadd.f32 0.0, %v323
    %v325 = vpop.f32.mrb[0].mxu0
    %v326 = vpop.f32.mrb[0].mxu0
    %327 = vdwg.mxu0
    %328 = vmatprep.subr.bf16.mxu0 %v98
    %329 = vmatpush1.bf16.msra.mxu0 %v97
    %330 = vmatprep.subr.bf16.mxu0 0
    %331 = vmatpush1.bf16.msra.mxu0 0
    %332 = vmatprep.subr.bf16.mxu0 0
    %333 = vmatpush1.bf16.msra.mxu0 0
    %334 = vmatprep.subr.bf16.mxu0 0
    %335 = vmatpush1.bf16.msra.mxu0 0
    %336 = vmatprep.subr.bf16.mxu0 0
    %337 = vmatpush1.bf16.msra.mxu0 0
    %338 = vmatprep.subr.bf16.mxu0 0
    %339 = vmatpush1.bf16.msra.mxu0 0
    %340 = vmatprep.subr.bf16.mxu0 0
    %341 = vmatpush1.bf16.msra.mxu0 0
    %342 = vmatprep.subr.bf16.mxu0 0
    %343 = vmatpush1.bf16.msra.mxu0 0
    %344 = vmatprep.subr.bf16.mxu0 0
    %345 = vmatpush1.bf16.msra.mxu0 0
    %346 = vmatprep.subr.bf16.mxu0 0
    %347 = vmatpush1.bf16.msra.mxu0 0
    %348 = vmatprep.subr.bf16.mxu0 0
    %349 = vmatpush1.bf16.msra.mxu0 0
    %350 = vmatprep.subr.bf16.mxu0 0
    %351 = vmatpush1.bf16.msra.mxu0 0
    %352 = vmatprep.subr.bf16.mxu0 0
    %353 = vmatpush1.bf16.msra.mxu0 0
    %354 = vmatprep.subr.bf16.mxu0 0
    %355 = vmatpush1.bf16.msra.mxu0 0
    %356 = vmatprep.subr.bf16.mxu0 0
    %357 = vmatpush1.bf16.msra.mxu0 0
    %358 = vmatprep.subr.bf16.mxu0 0
    %359 = vmatpush1.bf16.msra.mxu0 0
    %360 = vmatprep.mubr.bf16.mxu0 0
    %361 = vmatmul.mubr.bf16.gmra.mrb[0].mxu0 %v121
    %v362 = vpop.f32.mrb[0].mxu0
    %v363 = vadd.f32 0.0, %v362
    %v364 = vpop.f32.mrb[0].mxu0
    %v365 = vadd.f32 0.0, %v364
    %v366 = vpop.f32.mrb[0].mxu0
    %v367 = vpop.f32.mrb[0].mxu0
    %368 = vdwg.mxu0
    %369 = vmatprep.subr.bf16.mxu0 %v100
    %370 = vmatpush1.bf16.msra.mxu0 %v99
    %371 = vmatprep.subr.bf16.mxu0 0
    %372 = vmatpush1.bf16.msra.mxu0 0
    %373 = vmatprep.subr.bf16.mxu0 0
    %374 = vmatpush1.bf16.msra.mxu0 0
    %375 = vmatprep.subr.bf16.mxu0 0
    %376 = vmatpush1.bf16.msra.mxu0 0
    %377 = vmatprep.subr.bf16.mxu0 0
    %378 = vmatpush1.bf16.msra.mxu0 0
    %379 = vmatprep.subr.bf16.mxu0 0
    %380 = vmatpush1.bf16.msra.mxu0 0
    %381 = vmatprep.subr.bf16.mxu0 0
    %382 = vmatpush1.bf16.msra.mxu0 0
    %383 = vmatprep.subr.bf16.mxu0 0
    %384 = vmatpush1.bf16.msra.mxu0 0
    %385 = vmatprep.subr.bf16.mxu0 0
    %386 = vmatpush1.bf16.msra.mxu0 0
    %387 = vmatprep.subr.bf16.mxu0 0
    %388 = vmatpush1.bf16.msra.mxu0 0
    %389 = vmatprep.subr.bf16.mxu0 0
    %390 = vmatpush1.bf16.msra.mxu0 0
    %391 = vmatprep.subr.bf16.mxu0 0
    %392 = vmatpush1.bf16.msra.mxu0 0
    %393 = vmatprep.subr.bf16.mxu0 0
    %394 = vmatpush1.bf16.msra.mxu0 0
    %395 = vmatprep.subr.bf16.mxu0 0
    %396 = vmatpush1.bf16.msra.mxu0 0
    %397 = vmatprep.subr.bf16.mxu0 0
    %398 = vmatpush1.bf16.msra.mxu0 0
    %399 = vmatprep.subr.bf16.mxu0 0
    %400 = vmatpush1.bf16.msra.mxu0 0
    %401 = vmatprep.mubr.bf16.mxu0 0
    %402 = vmatmul.mubr.bf16.gmra.mrb[0].mxu0 %v121
    %v403 = vpop.f32.mrb[0].mxu0
    %v404 = vadd.f32 0.0, %v403
    %v405 = vpop.f32.mrb[0].mxu0
    %v406 = vadd.f32 0.0, %v405
    %v407 = vpop.f32.mrb[0].mxu0
    %v408 = vpop.f32.mrb[0].mxu0
    %409 = vdwg.mxu0
    %410 = vmatprep.subr.bf16.mxu0 %v102
    %411 = vmatpush1.bf16.msra.mxu0 %v101
    %412 = vmatprep.subr.bf16.mxu0 0
    %413 = vmatpush1.bf16.msra.mxu0 0
    %414 = vmatprep.subr.bf16.mxu0 0
    %415 = vmatpush1.bf16.msra.mxu0 0
    %416 = vmatprep.subr.bf16.mxu0 0
    %417 = vmatpush1.bf16.msra.mxu0 0
    %418 = vmatprep.subr.bf16.mxu0 0
    %419 = vmatpush1.bf16.msra.mxu0 0
    %420 = vmatprep.subr.bf16.mxu0 0
    %421 = vmatpush1.bf16.msra.mxu0 0
    %422 = vmatprep.subr.bf16.mxu0 0
    %423 = vmatpush1.bf16.msra.mxu0 0
    %424 = vmatprep.subr.bf16.mxu0 0
    %425 = vmatpush1.bf16.msra.mxu0 0
    %426 = vmatprep.subr.bf16.mxu0 0
    %427 = vmatpush1.bf16.msra.mxu0 0
    %428 = vmatprep.subr.bf16.mxu0 0
    %429 = vmatpush1.bf16.msra.mxu0 0
    %430 = vmatprep.subr.bf16.mxu0 0
    %431 = vmatpush1.bf16.msra.mxu0 0
    %432 = vmatprep.subr.bf16.mxu0 0
    %433 = vmatpush1.bf16.msra.mxu0 0
    %434 = vmatprep.subr.bf16.mxu0 0
    %435 = vmatpush1.bf16.msra.mxu0 0
    %436 = vmatprep.subr.bf16.mxu0 0
    %437 = vmatpush1.bf16.msra.mxu0 0
    %438 = vmatprep.subr.bf16.mxu0 0
    %439 = vmatpush1.bf16.msra.mxu0 0
    %440 = vmatprep.subr.bf16.mxu0 0
    %441 = vmatpush1.bf16.msra.mxu0 0
    %442 = vmatprep.mubr.bf16.mxu0 0
    %443 = vmatmul.mubr.bf16.gmra.mrb[0].mxu0 %v121
    %v444 = vpop.f32.mrb[0].mxu0
    %v445 = vadd.f32 0.0, %v444
    %v446 = vpop.f32.mrb[0].mxu0
    %v447 = vadd.f32 0.0, %v446
    %v448 = vpop.f32.mrb[0].mxu0
    %v449 = vpop.f32.mrb[0].mxu0
    %450 = vdwg.mxu0
    %v451 = vld [vmem:[%s2] sm:$0x3f]
    %v452 = vmax.f32 %v158, %v199
    %v453 = vmax.f32 %v160, %v201
    %v454 = vmax.f32 %v452, %v240
    %v455 = vmax.f32 %v453, %v242
    %v456 = vmax.f32 %v454, %v281
    %v457 = vmax.f32 %v455, %v283
    %459 = vset.pattern.permute.xlu0 0
    %460 = vperm.xlu0 %459, %v451
    %v461 = vpop.permute.xlu0 %460
    %v463 = vadd.f32 %v456, %v461
    %v464 = vadd.f32 %v457, %v461
    %v465 = vmax.f32 %v463, 0.0
    %v466 = vmax.f32 %v464, 0.0
    %v469 = vcombine.low %v465, %v466
    %v471 = vunpack.c.l.s4 1966171168
    %v472 = vunpack.c.0.s8 %v471
    %v473 = vlaneseq
    %v474 = vshrl.u32 %v473, 7
    %v475 = vsub.s32 %v472, %v474
    %v476 = vrot.slane %v469, %v475
    %v478 = vunpack.c.l.s4 1966171168
    %v479 = vunpack.c.0.s8 %v478
    %v480 = vlaneseq
    %v481 = vshrl.u32 %v480, 7
    %v482 = vsub.s32 %v479, %v481
    %v483 = vrot.slane %v476, %v482
    %v485 = vlaneseq
    %vm486 = vcmp.ge.s32.totalorder %v485, 0
    %vm487 = vcmp.lt.s32.totalorder %v485, 256
    %vm488 = vmand %vm486, %vm487
    %489 = vst.msk [vmem:[#allocation2] ss:$2 sm:$0x3] %vm488, %v483
    %v490 = vcombine.high %v476, %v476
    %v492 = vunpack.c.l.s4 1966171168
    %v493 = vunpack.c.0.s8 %v492
    %v494 = vlaneseq
    %v495 = vshrl.u32 %v494, 7
    %v496 = vsub.s32 %v493, %v495
    %v497 = vrot.slane %v490, %v496
    %s499 = scalar_lea.vmem [#allocation2], 4
    %500 = vst.msk [vmem:[%s499] ss:$2 sm:$0x3] %vm488, %v497
    %v501 = vcombine.high %v483, %v483
    %s503 = scalar_lea.vmem [#allocation2], 8
    %504 = vst.msk [vmem:[%s503] ss:$2 sm:$0x3] %vm488, %v501
    %v505 = vcombine.high %v497, %v497
    %s507 = scalar_lea.vmem [#allocation2], 12
    %508 = vst.msk [vmem:[%s507] ss:$2 sm:$0x3] %vm488, %v505
    %v509 = vcombine.high %v465, %v466
    %v511 = vunpack.c.l.s4 1966171168
    %v512 = vunpack.c.0.s8 %v511
    %v513 = vlaneseq
    %v514 = vshrl.u32 %v513, 7
    %v515 = vsub.s32 %v512, %v514
    %v516 = vrot.slane %v509, %v515
    %v518 = vunpack.c.l.s4 1966171168
    %v519 = vunpack.c.0.s8 %v518
    %v520 = vlaneseq
    %v521 = vshrl.u32 %v520, 7
    %v522 = vsub.s32 %v519, %v521
    %v523 = vrot.slane %v516, %v522
    %s525 = scalar_lea.vmem [#allocation2], 16
    %526 = vst.msk [vmem:[%s525] ss:$2 sm:$0x3] %vm488, %v523
    %v527 = vcombine.high %v516, %v516
    %v529 = vunpack.c.l.s4 1966171168
    %v530 = vunpack.c.0.s8 %v529
    %v531 = vlaneseq
    %v532 = vshrl.u32 %v531, 7
    %v533 = vsub.s32 %v530, %v532
    %v534 = vrot.slane %v527, %v533
    %s536 = scalar_lea.vmem [#allocation2], 20
    %537 = vst.msk [vmem:[%s536] ss:$2 sm:$0x3] %vm488, %v534
    %v538 = vmax.f32 %v322, %v363
    %v539 = vmax.f32 %v324, %v365
    %v540 = vmax.f32 %v538, %v404
    %v541 = vmax.f32 %v539, %v406
    %v542 = vmax.f32 %v540, %v445
    %v543 = vmax.f32 %v541, %v447
    %v544 = vadd.f32 %v542, %v461
    %v545 = vadd.f32 %v543, %v461
    %v546 = vmax.f32 %v544, 0.0
    %v547 = vmax.f32 %v545, 0.0
    %v550 = vcombine.low %v546, %v547
    %v552 = vunpack.c.l.s4 1966171168
    %v553 = vunpack.c.0.s8 %v552
    %v554 = vlaneseq
    %v555 = vshrl.u32 %v554, 7
    %v556 = vsub.s32 %v553, %v555
    %v557 = vrot.slane %v550, %v556
    %v559 = vunpack.c.l.s4 1966171168
    %v560 = vunpack.c.0.s8 %v559
    %v561 = vlaneseq
    %v562 = vshrl.u32 %v561, 7
    %v563 = vsub.s32 %v560, %v562
    %v564 = vrot.slane %v557, %v563
    %s566 = scalar_lea.vmem [#allocation2], 1
    %567 = vst.msk [vmem:[%s566] ss:$2 sm:$0x3] %vm488, %v564
    %v568 = vcombine.high %v557, %v557
    %v570 = vunpack.c.l.s4 1966171168
    %v571 = vunpack.c.0.s8 %v570
    %v572 = vlaneseq
    %v573 = vshrl.u32 %v572, 7
    %v574 = vsub.s32 %v571, %v573
    %v575 = vrot.slane %v568, %v574
    %s577 = scalar_lea.vmem [#allocation2], 5
    %578 = vst.msk [vmem:[%s577] ss:$2 sm:$0x3] %vm488, %v575
    %v579 = vcombine.high %v564, %v564
    %s581 = scalar_lea.vmem [#allocation2], 9
    %582 = vst.msk [vmem:[%s581] ss:$2 sm:$0x3] %vm488, %v579
    %v583 = vcombine.high %v575, %v575
    %s585 = scalar_lea.vmem [#allocation2], 13
    %586 = vst.msk [vmem:[%s585] ss:$2 sm:$0x3] %vm488, %v583
    %v587 = vcombine.high %v546, %v547
    %v589 = vunpack.c.l.s4 1966171168
    %v590 = vunpack.c.0.s8 %v589
    %v591 = vlaneseq
    %v592 = vshrl.u32 %v591, 7
    %v593 = vsub.s32 %v590, %v592
    %v594 = vrot.slane %v587, %v593
    %v596 = vunpack.c.l.s4 1966171168
    %v597 = vunpack.c.0.s8 %v596
    %v598 = vlaneseq
    %v599 = vshrl.u32 %v598, 7
    %v600 = vsub.s32 %v597, %v599
    %v601 = vrot.slane %v594, %v600
    %s603 = scalar_lea.vmem [#allocation2], 17
    %604 = vst.msk [vmem:[%s603] ss:$2 sm:$0x3] %vm488, %v601
    %v605 = vcombine.high %v594, %v594
    %v607 = vunpack.c.l.s4 1966171168
    %v608 = vunpack.c.0.s8 %v607
    %v609 = vlaneseq
    %v610 = vshrl.u32 %v609, 7
    %v611 = vsub.s32 %v608, %v610
    %v612 = vrot.slane %v605, %v611
    %s614 = scalar_lea.vmem [#allocation2], 21
    %615 = vst.msk [vmem:[%s614] ss:$2 sm:$0x3] %vm488, %v612
    %v616 = vld [vmem:[#allocation2] sm:$0xff]
    %v617 = vld [vmem:[#allocation2 + $0x8] sm:$0xff]
    %v618 = vld [vmem:[#allocation2 + $0x10] sm:$0xff]
    %v619 = vld [vmem:[%s3] sm:$0xff]
    %v620 = vld [vmem:[%s3 + $0x8] sm:$0xff]
    %v621 = vld [vmem:[%s3 + $0x10] sm:$0xff]
    %v622 = vld [vmem:[%s3 + $0x18] sm:$0xff]
    %v623 = vld [vmem:[%s3 + $0x20] sm:$0xff]
    %v624 = vld [vmem:[%s3 + $0x28] sm:$0xff]
    %v625 = vld [vmem:[%s3 + $0x30] sm:$0xff]
    %v626 = vld [vmem:[%s3 + $0x38] sm:$0xff]
    %v627 = vld [vmem:[%s3 + $0x40] sm:$0xff]
    %v628 = vld [vmem:[%s3 + $0x48] sm:$0xff]
    %v629 = vld [vmem:[%s3 + $0x50] sm:$0xff]
    %v630 = vld [vmem:[%s3 + $0x58] sm:$0xff]
    %v631 = vunpack.c.l.bf16 %v619
    %v632 = vunpack.c.h.bf16 %v619
    %v633 = vunpack.c.l.bf16 %v620
    %v634 = vunpack.c.h.bf16 %v620
    %v635 = vunpack.c.l.bf16 %v621
    %v636 = vunpack.c.h.bf16 %v621
    %v637 = vunpack.c.l.bf16 %v622
    %v638 = vunpack.c.h.bf16 %v622
    %v639 = vunpack.c.l.bf16 %v623
    %v640 = vunpack.c.h.bf16 %v623
    %v641 = vunpack.c.l.bf16 %v624
    %v642 = vunpack.c.h.bf16 %v624
    %v643 = vunpack.c.l.bf16 %v625
    %v644 = vunpack.c.h.bf16 %v625
    %v645 = vunpack.c.l.bf16 %v626
    %v646 = vunpack.c.h.bf16 %v626
    %v647 = vunpack.c.l.bf16 %v627
    %v648 = vunpack.c.h.bf16 %v627
    %v649 = vunpack.c.l.bf16 %v628
    %v650 = vunpack.c.h.bf16 %v628
    %v651 = vunpack.c.l.bf16 %v629
    %v652 = vunpack.c.h.bf16 %v629
    %v653 = vunpack.c.l.bf16 %v630
    %v654 = vunpack.c.h.bf16 %v630
    %v655 = vld [vmem:[%s4] sm:$0x1]
    %v657 = vlaneseq
    %v658 = vshrl.u32 %v657, 7
    %v659 = vsub.s32 0, %v658
    %v660 = vrot.slane %v655, %v659
    %v665 = vcombine.high %v616, %v616
    %v667 = vunpack.c.l.s4 1983009808
    %v668 = vunpack.c.0.s8 %v667
    %v669 = vlaneseq
    %v670 = vshrl.u32 %v669, 7
    %v671 = vsub.s32 %v668, %v670
    %v672 = vrot.slane %v616, %v671
    %v674 = vunpack.c.l.s4 1983009808
    %v675 = vunpack.c.0.s8 %v674
    %v676 = vlaneseq
    %v677 = vshrl.u32 %v676, 7
    %v678 = vsub.s32 %v675, %v677
    %v679 = vrot.slane %v665, %v678
    %v680 = vcombine.high %v672, %v672
    %v681 = vcombine.high %v679, %v679
    %v682 = vcombine.high %v617, %v617
    %v684 = vunpack.c.l.s4 1983009808
    %v685 = vunpack.c.0.s8 %v684
    %v686 = vlaneseq
    %v687 = vshrl.u32 %v686, 7
    %v688 = vsub.s32 %v685, %v687
    %v689 = vrot.slane %v617, %v688
    %v691 = vunpack.c.l.s4 1983009808
    %v692 = vunpack.c.0.s8 %v691
    %v693 = vlaneseq
    %v694 = vshrl.u32 %v693, 7
    %v695 = vsub.s32 %v692, %v694
    %v696 = vrot.slane %v682, %v695
    %v697 = vcombine.high %v689, %v689
    %v698 = vcombine.high %v696, %v696
    %v699 = vcombine.high %v618, %v618
    %v701 = vunpack.c.l.s4 1983009808
    %v702 = vunpack.c.0.s8 %v701
    %v703 = vlaneseq
    %v704 = vshrl.u32 %v703, 7
    %v705 = vsub.s32 %v702, %v704
    %v706 = vrot.slane %v618, %v705
    %v708 = vunpack.c.l.s4 1983009808
    %v709 = vunpack.c.0.s8 %v708
    %v710 = vlaneseq
    %v711 = vshrl.u32 %v710, 7
    %v712 = vsub.s32 %v709, %v711
    %v713 = vrot.slane %v699, %v712
    %v714 = vcombine.high %v706, %v706
    %v715 = vcombine.high %v713, %v713
    %728 = vmatprep.subr.mxu0 %v632
    %729 = vmatpush1.xpose.msra.mxu0 %v631
    %730 = vmatprep.subr.mxu0 %v644
    %731 = vmatpush1.xpose.msra.mxu0 %v643
    %732 = vmatprep.subr.mxu0 0.0
    %733 = vmatpush1.xpose.msra.mxu0 0.0
    %734 = vmatprep.subr.mxu0 0.0
    %735 = vmatpush1.xpose.msra.mxu0 0.0
    %736 = vmatprep.subr.mxu0 0.0
    %737 = vmatpush1.xpose.msra.mxu0 0.0
    %738 = vmatprep.subr.mxu0 0.0
    %739 = vmatpush1.xpose.msra.mxu0 0.0
    %740 = vmatprep.subr.mxu0 0.0
    %741 = vmatpush1.xpose.msra.mxu0 0.0
    %742 = vmatprep.subr.mxu0 0.0
    %743 = vmatpush1.xpose.msra.mxu0 0.0
    %744 = vmatprep.subr.mxu0 0.0
    %745 = vmatpush1.xpose.msra.mxu0 0.0
    %746 = vmatprep.subr.mxu0 0.0
    %747 = vmatpush1.xpose.msra.mxu0 0.0
    %748 = vmatprep.subr.mxu0 0.0
    %749 = vmatpush1.xpose.msra.mxu0 0.0
    %750 = vmatprep.subr.mxu0 0.0
    %751 = vmatpush1.xpose.msra.mxu0 0.0
    %752 = vmatprep.subr.mxu0 0.0
    %753 = vmatpush1.xpose.msra.mxu0 0.0
    %754 = vmatprep.subr.mxu0 0.0
    %755 = vmatpush1.xpose.msra.mxu0 0.0
    %756 = vmatprep.subr.mxu0 0.0
    %757 = vmatpush1.xpose.msra.mxu0 0.0
    %758 = vmatprep.subr.mxu0 0.0
    %759 = vmatpush1.xpose.msra.mxu0 0.0
    %760 = vmatprep.subr.mxu0 0.0
    %761 = vmatpush1.xpose.msra.mxu0 0.0
    %762 = vmatprep.subr.mxu0 0.0
    %763 = vmatpush1.xpose.msra.mxu0 0.0
    %764 = vmatprep.subr.mxu0 0.0
    %765 = vmatpush1.xpose.msra.mxu0 0.0
    %766 = vmatprep.subr.mxu0 0.0
    %767 = vmatpush1.xpose.msra.mxu0 0.0
    %768 = vmatprep.subr.mxu0 0.0
    %769 = vmatpush1.xpose.msra.mxu0 0.0
    %770 = vmatprep.subr.mxu0 0.0
    %771 = vmatpush1.xpose.msra.mxu0 0.0
    %772 = vmatprep.subr.mxu0 0.0
    %773 = vmatpush1.xpose.msra.mxu0 0.0
    %774 = vmatprep.subr.mxu0 0.0
    %775 = vmatpush1.xpose.msra.mxu0 0.0
    %776 = vmatprep.subr.mxu0 0.0
    %777 = vmatpush1.xpose.msra.mxu0 0.0
    %778 = vmatprep.subr.mxu0 0.0
    %779 = vmatpush1.xpose.msra.mxu0 0.0
    %780 = vmatprep.subr.mxu0 0.0
    %781 = vmatpush1.xpose.msra.mxu0 0.0
    %782 = vmatprep.subr.mxu0 0.0
    %783 = vmatpush1.xpose.msra.mxu0 0.0
    %784 = vmatprep.subr.mxu0 0.0
    %785 = vmatpush1.xpose.msra.mxu0 0.0
    %786 = vmatprep.subr.mxu0 0.0
    %787 = vmatpush1.xpose.msra.mxu0 0.0
    %788 = vmatprep.subr.mxu0 0.0
    %789 = vmatpush1.xpose.msra.mxu0 0.0
    %790 = vmatprep.subr.mxu0 0.0
    %791 = vmatpush1.xpose.msra.mxu0 0.0
    %792 = vmatprep.mubr.f32.mxu0 %v680
    %793 = vmatmul.mubr.f32.gmra.mrb[0].mxu0 %v672
    %v794 = vpop.f32.mrb[0].mxu0
    %v795 = vadd.f32 %v660, %v794
    %v796 = vpop.f32.mrb[0].mxu0
    %797 = vdwg.mxu0
    %798 = vmatprep.subr.mxu0 %v634
    %799 = vmatpush1.xpose.msra.mxu0 %v633
    %800 = vmatprep.subr.mxu0 %v646
    %801 = vmatpush1.xpose.msra.mxu0 %v645
    %802 = vmatprep.subr.mxu0 0.0
    %803 = vmatpush1.xpose.msra.mxu0 0.0
    %804 = vmatprep.subr.mxu0 0.0
    %805 = vmatpush1.xpose.msra.mxu0 0.0
    %806 = vmatprep.subr.mxu0 0.0
    %807 = vmatpush1.xpose.msra.mxu0 0.0
    %808 = vmatprep.subr.mxu0 0.0
    %809 = vmatpush1.xpose.msra.mxu0 0.0
    %810 = vmatprep.subr.mxu0 0.0
    %811 = vmatpush1.xpose.msra.mxu0 0.0
    %812 = vmatprep.subr.mxu0 0.0
    %813 = vmatpush1.xpose.msra.mxu0 0.0
    %814 = vmatprep.subr.mxu0 0.0
    %815 = vmatpush1.xpose.msra.mxu0 0.0
    %816 = vmatprep.subr.mxu0 0.0
    %817 = vmatpush1.xpose.msra.mxu0 0.0
    %818 = vmatprep.subr.mxu0 0.0
    %819 = vmatpush1.xpose.msra.mxu0 0.0
    %820 = vmatprep.subr.mxu0 0.0
    %821 = vmatpush1.xpose.msra.mxu0 0.0
    %822 = vmatprep.subr.mxu0 0.0
    %823 = vmatpush1.xpose.msra.mxu0 0.0
    %824 = vmatprep.subr.mxu0 0.0
    %825 = vmatpush1.xpose.msra.mxu0 0.0
    %826 = vmatprep.subr.mxu0 0.0
    %827 = vmatpush1.xpose.msra.mxu0 0.0
    %828 = vmatprep.subr.mxu0 0.0
    %829 = vmatpush1.xpose.msra.mxu0 0.0
    %830 = vmatprep.subr.mxu0 0.0
    %831 = vmatpush1.xpose.msra.mxu0 0.0
    %832 = vmatprep.subr.mxu0 0.0
    %833 = vmatpush1.xpose.msra.mxu0 0.0
    %834 = vmatprep.subr.mxu0 0.0
    %835 = vmatpush1.xpose.msra.mxu0 0.0
    %836 = vmatprep.subr.mxu0 0.0
    %837 = vmatpush1.xpose.msra.mxu0 0.0
    %838 = vmatprep.subr.mxu0 0.0
    %839 = vmatpush1.xpose.msra.mxu0 0.0
    %840 = vmatprep.subr.mxu0 0.0
    %841 = vmatpush1.xpose.msra.mxu0 0.0
    %842 = vmatprep.subr.mxu0 0.0
    %843 = vmatpush1.xpose.msra.mxu0 0.0
    %844 = vmatprep.subr.mxu0 0.0
    %845 = vmatpush1.xpose.msra.mxu0 0.0
    %846 = vmatprep.subr.mxu0 0.0
    %847 = vmatpush1.xpose.msra.mxu0 0.0
    %848 = vmatprep.subr.mxu0 0.0
    %849 = vmatpush1.xpose.msra.mxu0 0.0
    %850 = vmatprep.subr.mxu0 0.0
    %851 = vmatpush1.xpose.msra.mxu0 0.0
    %852 = vmatprep.subr.mxu0 0.0
    %853 = vmatpush1.xpose.msra.mxu0 0.0
    %854 = vmatprep.subr.mxu0 0.0
    %855 = vmatpush1.xpose.msra.mxu0 0.0
    %856 = vmatprep.subr.mxu0 0.0
    %857 = vmatpush1.xpose.msra.mxu0 0.0
    %858 = vmatprep.subr.mxu0 0.0
    %859 = vmatpush1.xpose.msra.mxu0 0.0
    %860 = vmatprep.subr.mxu0 0.0
    %861 = vmatpush1.xpose.msra.mxu0 0.0
    %862 = vmatprep.mubr.f32.mxu0 %v681
    %863 = vmatmul.mubr.f32.gmra.mrb[0].mxu0 %v679
    %v864 = vpop.f32.mrb[0].mxu0
    %v865 = vadd.f32 %v795, %v864
    %v866 = vpop.f32.mrb[0].mxu0
    %867 = vdwg.mxu0
    %868 = vmatprep.subr.mxu0 %v636
    %869 = vmatpush1.xpose.msra.mxu0 %v635
    %870 = vmatprep.subr.mxu0 %v648
    %871 = vmatpush1.xpose.msra.mxu0 %v647
    %872 = vmatprep.subr.mxu0 0.0
    %873 = vmatpush1.xpose.msra.mxu0 0.0
    %874 = vmatprep.subr.mxu0 0.0
    %875 = vmatpush1.xpose.msra.mxu0 0.0
    %876 = vmatprep.subr.mxu0 0.0
    %877 = vmatpush1.xpose.msra.mxu0 0.0
    %878 = vmatprep.subr.mxu0 0.0
    %879 = vmatpush1.xpose.msra.mxu0 0.0
    %880 = vmatprep.subr.mxu0 0.0
    %881 = vmatpush1.xpose.msra.mxu0 0.0
    %882 = vmatprep.subr.mxu0 0.0
    %883 = vmatpush1.xpose.msra.mxu0 0.0
    %884 = vmatprep.subr.mxu0 0.0
    %885 = vmatpush1.xpose.msra.mxu0 0.0
    %886 = vmatprep.subr.mxu0 0.0
    %887 = vmatpush1.xpose.msra.mxu0 0.0
    %888 = vmatprep.subr.mxu0 0.0
    %889 = vmatpush1.xpose.msra.mxu0 0.0
    %890 = vmatprep.subr.mxu0 0.0
    %891 = vmatpush1.xpose.msra.mxu0 0.0
    %892 = vmatprep.subr.mxu0 0.0
    %893 = vmatpush1.xpose.msra.mxu0 0.0
    %894 = vmatprep.subr.mxu0 0.0
    %895 = vmatpush1.xpose.msra.mxu0 0.0
    %896 = vmatprep.subr.mxu0 0.0
    %897 = vmatpush1.xpose.msra.mxu0 0.0
    %898 = vmatprep.subr.mxu0 0.0
    %899 = vmatpush1.xpose.msra.mxu0 0.0
    %900 = vmatprep.subr.mxu0 0.0
    %901 = vmatpush1.xpose.msra.mxu0 0.0
    %902 = vmatprep.subr.mxu0 0.0
    %903 = vmatpush1.xpose.msra.mxu0 0.0
    %904 = vmatprep.subr.mxu0 0.0
    %905 = vmatpush1.xpose.msra.mxu0 0.0
    %906 = vmatprep.subr.mxu0 0.0
    %907 = vmatpush1.xpose.msra.mxu0 0.0
    %908 = vmatprep.subr.mxu0 0.0
    %909 = vmatpush1.xpose.msra.mxu0 0.0
    %910 = vmatprep.subr.mxu0 0.0
    %911 = vmatpush1.xpose.msra.mxu0 0.0
    %912 = vmatprep.subr.mxu0 0.0
    %913 = vmatpush1.xpose.msra.mxu0 0.0
    %914 = vmatprep.subr.mxu0 0.0
    %915 = vmatpush1.xpose.msra.mxu0 0.0
    %916 = vmatprep.subr.mxu0 0.0
    %917 = vmatpush1.xpose.msra.mxu0 0.0
    %918 = vmatprep.subr.mxu0 0.0
    %919 = vmatpush1.xpose.msra.mxu0 0.0
    %920 = vmatprep.subr.mxu0 0.0
    %921 = vmatpush1.xpose.msra.mxu0 0.0
    %922 = vmatprep.subr.mxu0 0.0
    %923 = vmatpush1.xpose.msra.mxu0 0.0
    %924 = vmatprep.subr.mxu0 0.0
    %925 = vmatpush1.xpose.msra.mxu0 0.0
    %926 = vmatprep.subr.mxu0 0.0
    %927 = vmatpush1.xpose.msra.mxu0 0.0
    %928 = vmatprep.subr.mxu0 0.0
    %929 = vmatpush1.xpose.msra.mxu0 0.0
    %930 = vmatprep.subr.mxu0 0.0
    %931 = vmatpush1.xpose.msra.mxu0 0.0
    %932 = vmatprep.mubr.f32.mxu0 %v697
    %933 = vmatmul.mubr.f32.gmra.mrb[0].mxu0 %v689
    %v934 = vpop.f32.mrb[0].mxu0
    %v935 = vadd.f32 %v865, %v934
    %v936 = vpop.f32.mrb[0].mxu0
    %937 = vdwg.mxu0
    %938 = vmatprep.subr.mxu0 %v638
    %939 = vmatpush1.xpose.msra.mxu0 %v637
    %940 = vmatprep.subr.mxu0 %v650
    %941 = vmatpush1.xpose.msra.mxu0 %v649
    %942 = vmatprep.subr.mxu0 0.0
    %943 = vmatpush1.xpose.msra.mxu0 0.0
    %944 = vmatprep.subr.mxu0 0.0
    %945 = vmatpush1.xpose.msra.mxu0 0.0
    %946 = vmatprep.subr.mxu0 0.0
    %947 = vmatpush1.xpose.msra.mxu0 0.0
    %948 = vmatprep.subr.mxu0 0.0
    %949 = vmatpush1.xpose.msra.mxu0 0.0
    %950 = vmatprep.subr.mxu0 0.0
    %951 = vmatpush1.xpose.msra.mxu0 0.0
    %952 = vmatprep.subr.mxu0 0.0
    %953 = vmatpush1.xpose.msra.mxu0 0.0
    %954 = vmatprep.subr.mxu0 0.0
    %955 = vmatpush1.xpose.msra.mxu0 0.0
    %956 = vmatprep.subr.mxu0 0.0
    %957 = vmatpush1.xpose.msra.mxu0 0.0
    %958 = vmatprep.subr.mxu0 0.0
    %959 = vmatpush1.xpose.msra.mxu0 0.0
    %960 = vmatprep.subr.mxu0 0.0
    %961 = vmatpush1.xpose.msra.mxu0 0.0
    %962 = vmatprep.subr.mxu0 0.0
    %963 = vmatpush1.xpose.msra.mxu0 0.0
    %964 = vmatprep.subr.mxu0 0.0
    %965 = vmatpush1.xpose.msra.mxu0 0.0
    %966 = vmatprep.subr.mxu0 0.0
    %967 = vmatpush1.xpose.msra.mxu0 0.0
    %968 = vmatprep.subr.mxu0 0.0
    %969 = vmatpush1.xpose.msra.mxu0 0.0
    %970 = vmatprep.subr.mxu0 0.0
    %971 = vmatpush1.xpose.msra.mxu0 0.0
    %972 = vmatprep.subr.mxu0 0.0
    %973 = vmatpush1.xpose.msra.mxu0 0.0
    %974 = vmatprep.subr.mxu0 0.0
    %975 = vmatpush1.xpose.msra.mxu0 0.0
    %976 = vmatprep.subr.mxu0 0.0
    %977 = vmatpush1.xpose.msra.mxu0 0.0
    %978 = vmatprep.subr.mxu0 0.0
    %979 = vmatpush1.xpose.msra.mxu0 0.0
    %980 = vmatprep.subr.mxu0 0.0
    %981 = vmatpush1.xpose.msra.mxu0 0.0
    %982 = vmatprep.subr.mxu0 0.0
    %983 = vmatpush1.xpose.msra.mxu0 0.0
    %984 = vmatprep.subr.mxu0 0.0
    %985 = vmatpush1.xpose.msra.mxu0 0.0
    %986 = vmatprep.subr.mxu0 0.0
    %987 = vmatpush1.xpose.msra.mxu0 0.0
    %988 = vmatprep.subr.mxu0 0.0
    %989 = vmatpush1.xpose.msra.mxu0 0.0
    %990 = vmatprep.subr.mxu0 0.0
    %991 = vmatpush1.xpose.msra.mxu0 0.0
    %992 = vmatprep.subr.mxu0 0.0
    %993 = vmatpush1.xpose.msra.mxu0 0.0
    %994 = vmatprep.subr.mxu0 0.0
    %995 = vmatpush1.xpose.msra.mxu0 0.0
    %996 = vmatprep.subr.mxu0 0.0
    %997 = vmatpush1.xpose.msra.mxu0 0.0
    %998 = vmatprep.subr.mxu0 0.0
    %999 = vmatpush1.xpose.msra.mxu0 0.0
    %1000 = vmatprep.subr.mxu0 0.0
    %1001 = vmatpush1.xpose.msra.mxu0 0.0
    %1002 = vmatprep.mubr.f32.mxu0 %v698
    %1003 = vmatmul.mubr.f32.gmra.mrb[0].mxu0 %v696
    %v1004 = vpop.f32.mrb[0].mxu0
    %v1005 = vadd.f32 %v935, %v1004
    %v1006 = vpop.f32.mrb[0].mxu0
    %1007 = vdwg.mxu0
    %1008 = vmatprep.subr.mxu0 %v640
    %1009 = vmatpush1.xpose.msra.mxu0 %v639
    %1010 = vmatprep.subr.mxu0 %v652
    %1011 = vmatpush1.xpose.msra.mxu0 %v651
    %1012 = vmatprep.subr.mxu0 0.0
    %1013 = vmatpush1.xpose.msra.mxu0 0.0
    %1014 = vmatprep.subr.mxu0 0.0
    %1015 = vmatpush1.xpose.msra.mxu0 0.0
    %1016 = vmatprep.subr.mxu0 0.0
    %1017 = vmatpush1.xpose.msra.mxu0 0.0
    %1018 = vmatprep.subr.mxu0 0.0
    %1019 = vmatpush1.xpose.msra.mxu0 0.0
    %1020 = vmatprep.subr.mxu0 0.0
    %1021 = vmatpush1.xpose.msra.mxu0 0.0
    %1022 = vmatprep.subr.mxu0 0.0
    %1023 = vmatpush1.xpose.msra.mxu0 0.0
    %1024 = vmatprep.subr.mxu0 0.0
    %1025 = vmatpush1.xpose.msra.mxu0 0.0
    %1026 = vmatprep.subr.mxu0 0.0
    %1027 = vmatpush1.xpose.msra.mxu0 0.0
    %1028 = vmatprep.subr.mxu0 0.0
    %1029 = vmatpush1.xpose.msra.mxu0 0.0
    %1030 = vmatprep.subr.mxu0 0.0
    %1031 = vmatpush1.xpose.msra.mxu0 0.0
    %1032 = vmatprep.subr.mxu0 0.0
    %1033 = vmatpush1.xpose.msra.mxu0 0.0
    %1034 = vmatprep.subr.mxu0 0.0
    %1035 = vmatpush1.xpose.msra.mxu0 0.0
    %1036 = vmatprep.subr.mxu0 0.0
    %1037 = vmatpush1.xpose.msra.mxu0 0.0
    %1038 = vmatprep.subr.mxu0 0.0
    %1039 = vmatpush1.xpose.msra.mxu0 0.0
    %1040 = vmatprep.subr.mxu0 0.0
    %1041 = vmatpush1.xpose.msra.mxu0 0.0
    %1042 = vmatprep.subr.mxu0 0.0
    %1043 = vmatpush1.xpose.msra.mxu0 0.0
    %1044 = vmatprep.subr.mxu0 0.0
    %1045 = vmatpush1.xpose.msra.mxu0 0.0
    %1046 = vmatprep.subr.mxu0 0.0
    %1047 = vmatpush1.xpose.msra.mxu0 0.0
    %1048 = vmatprep.subr.mxu0 0.0
    %1049 = vmatpush1.xpose.msra.mxu0 0.0
    %1050 = vmatprep.subr.mxu0 0.0
    %1051 = vmatpush1.xpose.msra.mxu0 0.0
    %1052 = vmatprep.subr.mxu0 0.0
    %1053 = vmatpush1.xpose.msra.mxu0 0.0
    %1054 = vmatprep.subr.mxu0 0.0
    %1055 = vmatpush1.xpose.msra.mxu0 0.0
    %1056 = vmatprep.subr.mxu0 0.0
    %1057 = vmatpush1.xpose.msra.mxu0 0.0
    %1058 = vmatprep.subr.mxu0 0.0
    %1059 = vmatpush1.xpose.msra.mxu0 0.0
    %1060 = vmatprep.subr.mxu0 0.0
    %1061 = vmatpush1.xpose.msra.mxu0 0.0
    %1062 = vmatprep.subr.mxu0 0.0
    %1063 = vmatpush1.xpose.msra.mxu0 0.0
    %1064 = vmatprep.subr.mxu0 0.0
    %1065 = vmatpush1.xpose.msra.mxu0 0.0
    %1066 = vmatprep.subr.mxu0 0.0
    %1067 = vmatpush1.xpose.msra.mxu0 0.0
    %1068 = vmatprep.subr.mxu0 0.0
    %1069 = vmatpush1.xpose.msra.mxu0 0.0
    %1070 = vmatprep.subr.mxu0 0.0
    %1071 = vmatpush1.xpose.msra.mxu0 0.0
    %1072 = vmatprep.mubr.f32.mxu0 %v714
    %1073 = vmatmul.mubr.f32.gmra.mrb[0].mxu0 %v706
    %v1074 = vpop.f32.mrb[0].mxu0
    %v1075 = vadd.f32 %v1005, %v1074
    %v1076 = vpop.f32.mrb[0].mxu0
    %1077 = vdwg.mxu0
    %1078 = vmatprep.subr.mxu0 %v642
    %1079 = vmatpush1.xpose.msra.mxu0 %v641
    %1080 = vmatprep.subr.mxu0 %v654
    %1081 = vmatpush1.xpose.msra.mxu0 %v653
    %1082 = vmatprep.subr.mxu0 0.0
    %1083 = vmatpush1.xpose.msra.mxu0 0.0
    %1084 = vmatprep.subr.mxu0 0.0
    %1085 = vmatpush1.xpose.msra.mxu0 0.0
    %1086 = vmatprep.subr.mxu0 0.0
    %1087 = vmatpush1.xpose.msra.mxu0 0.0
    %1088 = vmatprep.subr.mxu0 0.0
    %1089 = vmatpush1.xpose.msra.mxu0 0.0
    %1090 = vmatprep.subr.mxu0 0.0
    %1091 = vmatpush1.xpose.msra.mxu0 0.0
    %1092 = vmatprep.subr.mxu0 0.0
    %1093 = vmatpush1.xpose.msra.mxu0 0.0
    %1094 = vmatprep.subr.mxu0 0.0
    %1095 = vmatpush1.xpose.msra.mxu0 0.0
    %1096 = vmatprep.subr.mxu0 0.0
    %1097 = vmatpush1.xpose.msra.mxu0 0.0
    %1098 = vmatprep.subr.mxu0 0.0
    %1099 = vmatpush1.xpose.msra.mxu0 0.0
    %1100 = vmatprep.subr.mxu0 0.0
    %1101 = vmatpush1.xpose.msra.mxu0 0.0
    %1102 = vmatprep.subr.mxu0 0.0
    %1103 = vmatpush1.xpose.msra.mxu0 0.0
    %1104 = vmatprep.subr.mxu0 0.0
    %1105 = vmatpush1.xpose.msra.mxu0 0.0
    %1106 = vmatprep.subr.mxu0 0.0
    %1107 = vmatpush1.xpose.msra.mxu0 0.0
    %1108 = vmatprep.subr.mxu0 0.0
    %1109 = vmatpush1.xpose.msra.mxu0 0.0
    %1110 = vmatprep.subr.mxu0 0.0
    %1111 = vmatpush1.xpose.msra.mxu0 0.0
    %1112 = vmatprep.subr.mxu0 0.0
    %1113 = vmatpush1.xpose.msra.mxu0 0.0
    %1114 = vmatprep.subr.mxu0 0.0
    %1115 = vmatpush1.xpose.msra.mxu0 0.0
    %1116 = vmatprep.subr.mxu0 0.0
    %1117 = vmatpush1.xpose.msra.mxu0 0.0
    %1118 = vmatprep.subr.mxu0 0.0
    %1119 = vmatpush1.xpose.msra.mxu0 0.0
    %1120 = vmatprep.subr.mxu0 0.0
    %1121 = vmatpush1.xpose.msra.mxu0 0.0
    %1122 = vmatprep.subr.mxu0 0.0
    %1123 = vmatpush1.xpose.msra.mxu0 0.0
    %1124 = vmatprep.subr.mxu0 0.0
    %1125 = vmatpush1.xpose.msra.mxu0 0.0
    %1126 = vmatprep.subr.mxu0 0.0
    %1127 = vmatpush1.xpose.msra.mxu0 0.0
    %1128 = vmatprep.subr.mxu0 0.0
    %1129 = vmatpush1.xpose.msra.mxu0 0.0
    %1130 = vmatprep.subr.mxu0 0.0
    %1131 = vmatpush1.xpose.msra.mxu0 0.0
    %1132 = vmatprep.subr.mxu0 0.0
    %1133 = vmatpush1.xpose.msra.mxu0 0.0
    %1134 = vmatprep.subr.mxu0 0.0
    %1135 = vmatpush1.xpose.msra.mxu0 0.0
    %1136 = vmatprep.subr.mxu0 0.0
    %1137 = vmatpush1.xpose.msra.mxu0 0.0
    %1138 = vmatprep.subr.mxu0 0.0
    %1139 = vmatpush1.xpose.msra.mxu0 0.0
    %1140 = vmatprep.subr.mxu0 0.0
    %1141 = vmatpush1.xpose.msra.mxu0 0.0
    %1142 = vmatprep.mubr.f32.mxu0 %v715
    %1143 = vmatmul.mubr.f32.gmra.mrb[0].mxu0 %v713
    %v1144 = vpop.f32.mrb[0].mxu0
    %v1145 = vadd.f32 %v1075, %v1144
    %v1146 = vpop.f32.mrb[0].mxu0
    %1147 = vdwg.mxu0
    %vm1148 = vcmask 123904
    %1149 = vst.msk [vmem:[#allocation3] sm:$0x3] %vm1148, %v1145
    // Predicated region
    $region22: #{net_forward.1} parent=1 // pred_check
      _
    $region23: #{net_forward.1} parent=1 // pred_check_branch
      %1151 = sbr.rel (0) target = $region25
    $region24: #{net_forward.1} parent=1 // pred_region
      %s1153 = ssub.s32 32, 32
      %1154 = vsyncadd [#allocation4], %s1153
      %s1156 = sshll.u32 [#allocation3], 4
      %s1157 = int_to_ptr.vmem [resolvable:$true] %s1156
      %1159 = dma.vmem_to_hbm [thread:$0]  %s1157, 32, %s5, [#allocation4]
    $region25: #{net_forward.1} parent=1 // pred_fallthru
      _
    // Predicated region
    $region26: #{net_forward.1} parent=1 // pred_check
      _
    $region27: #{net_forward.1} parent=1 // pred_check_branch
      %1161 = sbr.rel (0) target = $region29
    $region28: #{net_forward.1} parent=1 // pred_region
      %1162 = dma.done [#allocation4], 32
    $region29: #{net_forward.1} parent=1 // pred_fallthru
      _
    %1163 = vsyncpa [#allocation4], 1

</llo_original>
